<compile_context>
chip_gen: v5e
topology: v5e:2x2
jax: 0.10.0
libtpu: 0.0.40
codegen_flags: <defaults>
</compile_context>

<pallas_src>
import jax
import jax.numpy as jnp
from jax.experimental import pallas as pl
from jax.experimental.pallas import tpu as pltpu


def _round_up(x: int, m: int) -> int:
    return ((x + m - 1) // m) * m


def _vmem_capacity_bytes() -> int:
    """Physical VMEM per TensorCore; conservative fallback if unqueryable."""
    try:
        info = pltpu.get_tpu_info()
        for attr in ("vmem_capacity_bytes", "vmem_size_bytes", "vmem_bytes"):
            v = getattr(info, attr, None)
            if isinstance(v, int) and v > 0:
                return v
    except Exception:
        pass
    return 64 * 1024 * 1024  # v7x has the smallest physical VMEM per core.


def dqn_kernel(x_ref, w1_ref, b1_ref, w2_ref, b2_ref, o_ref):
    # fc1: (TB, in) contracted with w1 (hidden_p, in) over `in` -> (TB, hidden_p).
    # Contracting against the native nn.Linear (out_features, in_features)
    # layout lets the MXU take the transposed operand for free.
    h = jax.lax.dot_general(
        x_ref[...], w1_ref[...],
        dimension_numbers=(((1,), (1,)), ((), ())),
        preferred_element_type=jnp.float32,
    )
    h = jnp.maximum(h + b1_ref[...], 0.0)     # bias + ReLU (VPU, f32, lane-dense)
    # fc3: (TB, hidden_p) contracted with w2 (out, hidden_p) over `hidden_p`.
    y = jax.lax.dot_general(
        h, w2_ref[...],
        dimension_numbers=(((1,), (1,)), ((), ())),
        preferred_element_type=jnp.float32,
    )
    o_ref[...] = (y + b2_ref[...]).astype(o_ref.dtype)


def dqn_forward(x, w1, b1, w2, b2, *, block_b=None):
    """Forward pass of the DQN MLP: relu(x @ w1.T + b1) @ w2.T + b2.

    x:  (B, input_size)        float32
    w1: (hidden, input_size)   float32   (native nn.Linear layout)
    b1: (hidden,)              float32
    w2: (output, hidden)       float32   (native nn.Linear layout)
    b2: (output,)              float32
    returns (B, output) float32
    """
    B, in_size = x.shape
    hidden = w1.shape[0]
    out_size = w2.shape[0]
    x_it = jnp.dtype(x.dtype).itemsize
    w_it = jnp.dtype(w1.dtype).itemsize

    # --- lane-dense hidden dim: pad to a multiple of 128 ---------------------
    hidden_p = _round_up(hidden, 128)
    if hidden_p != hidden:
        w1 = jnp.pad(w1, ((0, hidden_p - hidden), (0, 0)))
        b1 = jnp.pad(b1, (0, hidden_p - hidden))
        w2 = jnp.pad(w2, ((0, 0), (0, hidden_p - hidden)))
    b1_2d = b1.reshape(1, hidden_p)
    b2_2d = b2.reshape(1, out_size)
    # in_size / out_size intentionally left unpadded: they are full-extent
    # block dims, and padding them would inflate per-row HBM traffic on the
    # batch-scaled x / out arrays (the dominant bytes term at large B).

    # --- generation-aware VMEM budget and batch-tile selection ---------------
    phys_vmem = _vmem_capacity_bytes()
    budget = max(16 << 20, min((phys_vmem * 3) // 4, phys_vmem - (24 << 20)))

    weight_bytes = w_it * (hidden_p * in_size + hidden_p
                           + out_size * hidden_p + out_size)
    weight_alloc = 2 * weight_bytes  # conservative: covers double-buffer fallback
    # per-row VMEM: double-buffered x/out blocks + f32 intermediates (h, y).
    per_row = (2 * in_size * x_it + 2 * out_size * x_it
               + 4 * (hidden_p + out_size))

    B8 = _round_up(B, 8)
    if block_b is None:
        avail = max(budget - weight_alloc, 8 * per_row)
        block_b = max(8, (avail // per_row) // 8 * 8)
        if B8 >= 16:
            # Keep >=2 grid steps so the "parallel" batch axis can be sharded
            # across both TensorCores on megacore parts (v7x).
            block_b = min(block_b, _round_up((B8 + 1) // 2, 8))
        else:
            block_b = min(block_b, B8)
    else:
        block_b = max(8, (int(block_b) // 8) * 8)

    # Pad the batch so every grid step sees a full tile.  Padded rows are
    # zeros; their outputs equal relu(b1) @ w2.T + b2 (NOT zero), but they are
    # sliced off below, so the visible result is exact.
    B_p = _round_up(B, block_b)
    if B_p != B:
        x = jnp.pad(x, ((0, B_p - B), (0, 0)))
    grid = (B_p // block_b,)

    vmem_needed = weight_alloc + block_b * per_row
    vmem_limit = int(min(phys_vmem - (2 << 20),
                         max(vmem_needed + (8 << 20), 32 << 20)))
    compiler_params = pltpu.CompilerParams(
        dimension_semantics=("parallel",),
        vmem_limit_bytes=vmem_limit,
    )
    cost = pl.CostEstimate(
        flops=2 * B_p * (in_size * hidden_p + hidden_p * out_size),
        transcendentals=0,
        bytes_accessed=(x_it * B_p * (in_size + out_size) + weight_bytes),
    )

    def build_call(single_buffer_weights: bool):
        def resident(shape):
            imap = lambda i: (0, 0)
            if single_buffer_weights:
                # Constant index_map -> fetched once; one buffer is enough.
                return pl.BlockSpec(shape, imap, pipeline_mode=pl.Buffered(1))
            return pl.BlockSpec(shape, imap)

        return pl.pallas_call(
            dqn_kernel,
            out_shape=jax.ShapeDtypeStruct((B_p, out_size), x.dtype),
            grid=grid,
            in_specs=[
                pl.BlockSpec((block_b, in_size), lambda i: (i, 0)),  # x: batch-tiled
                resident((hidden_p, in_size)),                       # w1: resident
                resident((1, hidden_p)),                             # b1: resident
                resident((out_size, hidden_p)),                      # w2: resident
                resident((1, out_size)),                             # b2: resident
            ],
            out_specs=pl.BlockSpec((block_b, out_size), lambda i: (i, 0)),
            compiler_params=compiler_params,
            cost_estimate=cost,
        )

    out = None
    last_err = None
    for single_buf in (True, False):
        try:
            out = build_call(single_buf)(x, w1, b1_2d, w2, b2_2d)
            break
        except Exception as e:  # fallback if pipeline_mode / pl.Buffered unsupported
            last_err = e
    if out is None:
        raise last_err

    return out[:B]


def init_dqn_params(key, input_size, hidden_size, output_size):
    """Deterministic init mimicking PyTorch nn.Linear default U[-1/sqrt(fan_in), 1/sqrt(fan_in)]."""
    k1, k2, k3, k4 = jax.random.split(key, 4)
    bound1 = 1.0 / jnp.sqrt(jnp.float32(input_size))
    bound2 = 1.0 / jnp.sqrt(jnp.float32(hidden_size))
    w1 = jax.random.uniform(k1, (hidden_size, input_size), jnp.float32, -bound1, bound1)
    b1 = jax.random.uniform(k2, (hidden_size,), jnp.float32, -bound1, bound1)
    w2 = jax.random.uniform(k3, (output_size, hidden_size), jnp.float32, -bound2, bound2)
    b2 = jax.random.uniform(k4, (output_size,), jnp.float32, -bound2, bound2)
    return w1, b1, w2, b2


if __name__ == "__main__":
    key = jax.random.PRNGKey(0)
    kx, kp = jax.random.split(key)

    # Small shapes consistent with the module's forward.
    batch, input_size, hidden_size, output_size = 8, 16, 32, 4

    x = jax.random.normal(kx, (batch, input_size), jnp.float32)
    w1, b1, w2, b2 = init_dqn_params(kp, input_size, hidden_size, output_size)

    out = dqn_forward(x, w1, b1, w2, b2)
    out = jax.block_until_ready(out)

    # Reference check in plain JAX (same math as the PyTorch module).
    ref = jnp.maximum(x @ w1.T + b1, 0.0) @ w2.T + b2
    assert out.shape == (batch, output_size)
    assert jnp.allclose(out, ref, atol=1e-5, rtol=1e-5)

    print("KERNEL_OK")
</pallas_src>

<mosaic_0001>
module attributes {stable_mosaic.version = 11 : i64} {
  func.func @dqn_kernel(%arg0: i32, %arg1: memref<8x16xf32, #tpu.memory_space<vmem>>, %arg2: memref<128x16xf32, #tpu.memory_space<vmem>>, %arg3: memref<1x128xf32, #tpu.memory_space<vmem>>, %arg4: memref<4x128xf32, #tpu.memory_space<vmem>>, %arg5: memref<1x4xf32, #tpu.memory_space<vmem>>, %arg6: memref<8x4xf32, #tpu.memory_space<vmem>>) attributes {dimension_semantics = [#tpu.dimension_semantics<parallel>], iteration_bounds = array<i64: 1>, scalar_prefetch = 0 : i64, scratch_operands = 0 : i64, tpu.core_type = #tpu.core_type<tc>, window_params = [{transform_indices = @transform_0, window_bounds = array<i64: 8, 16>}, {pipeline_mode = #tpu.pipeline_mode<synchronous>, transform_indices = @transform_1, window_bounds = array<i64: 128, 16>}, {pipeline_mode = #tpu.pipeline_mode<synchronous>, transform_indices = @transform_2, window_bounds = array<i64: 1, 128>}, {pipeline_mode = #tpu.pipeline_mode<synchronous>, transform_indices = @transform_3, window_bounds = array<i64: 4, 128>}, {pipeline_mode = #tpu.pipeline_mode<synchronous>, transform_indices = @transform_4, window_bounds = array<i64: 1, 4>}, {transform_indices = @transform_5, window_bounds = array<i64: 8, 4>}]} {
    %c0 = arith.constant 0 : index
    %c0_0 = arith.constant 0 : index
    %0 = vector.load %arg1[%c0, %c0_0] : memref<8x16xf32, #tpu.memory_space<vmem>>, vector<8x16xf32>
    %c0_1 = arith.constant 0 : index
    %c0_2 = arith.constant 0 : index
    %1 = vector.load %arg2[%c0_1, %c0_2] : memref<128x16xf32, #tpu.memory_space<vmem>>, vector<128x16xf32>
    %cst = arith.constant dense<0.000000e+00> : vector<8x128xf32>
    %2 = tpu.matmul %0, %1, %cst {dimension_numbers = #tpu.dot_dimension_numbers<[1], [1], [0], [0], [0, 0, 1, 0], [], []>} : vector<8x16xf32>, vector<128x16xf32>, vector<8x128xf32> -> vector<8x128xf32>
    %c0_3 = arith.constant 0 : index
    %c0_4 = arith.constant 0 : index
    %3 = vector.load %arg3[%c0_3, %c0_4] : memref<1x128xf32, #tpu.memory_space<vmem>>, vector<1x128xf32>
    %4 = vector.broadcast %3 : vector<1x128xf32> to vector<8x128xf32>
    %5 = arith.addf %2, %4 : vector<8x128xf32>
    %cst_5 = arith.constant 0.000000e+00 : f32
    %6 = vector.broadcast %cst_5 : f32 to vector<8x128xf32>
    %7 = arith.maximumf %5, %6 : vector<8x128xf32>
    %c0_6 = arith.constant 0 : index
    %c0_7 = arith.constant 0 : index
    %8 = vector.load %arg4[%c0_6, %c0_7] : memref<4x128xf32, #tpu.memory_space<vmem>>, vector<4x128xf32>
    %cst_8 = arith.constant dense<0.000000e+00> : vector<8x4xf32>
    %9 = tpu.matmul %7, %8, %cst_8 {dimension_numbers = #tpu.dot_dimension_numbers<[1], [1], [0], [0], [0, 0, 1, 0], [], []>} : vector<8x128xf32>, vector<4x128xf32>, vector<8x4xf32> -> vector<8x4xf32>
    %c0_9 = arith.constant 0 : index
    %c0_10 = arith.constant 0 : index
    %10 = vector.load %arg5[%c0_9, %c0_10] : memref<1x4xf32, #tpu.memory_space<vmem>>, vector<1x4xf32>
    %11 = vector.broadcast %10 : vector<1x4xf32> to vector<8x4xf32>
    %12 = arith.addf %9, %11 : vector<8x4xf32>
    %c0_11 = arith.constant 0 : index
    %c0_12 = arith.constant 0 : index
    %13 = vector.load %arg6[%c0_11, %c0_12] : memref<8x4xf32, #tpu.memory_space<vmem>>, vector<8x4xf32>
    tpu.vector_store %arg6[%c0_11, %c0_12], %12 {strides = array<i32>} : memref<8x4xf32, #tpu.memory_space<vmem>>, vector<8x4xf32>,
    return
  }
  func.func @transform_0(%arg0: i32) -> (i32, i32) {
    %c0_i32 = arith.constant 0 : i32
    %c0_i32_0 = arith.constant 0 : i32
    return %arg0, %c0_i32 : i32, i32
  }
  func.func @transform_1(%arg0: i32) -> (i32, i32) {
    %c0_i32 = arith.constant 0 : i32
    %c0_i32_0 = arith.constant 0 : i32
    %c0_i32_1 = arith.constant 0 : i32
    return %c0_i32, %c0_i32_0 : i32, i32
  }
  func.func @transform_2(%arg0: i32) -> (i32, i32) {
    %c0_i32 = arith.constant 0 : i32
    %c0_i32_0 = arith.constant 0 : i32
    %c0_i32_1 = arith.constant 0 : i32
    return %c0_i32, %c0_i32_0 : i32, i32
  }
  func.func @transform_3(%arg0: i32) -> (i32, i32) {
    %c0_i32 = arith.constant 0 : i32
    %c0_i32_0 = arith.constant 0 : i32
    %c0_i32_1 = arith.constant 0 : i32
    return %c0_i32, %c0_i32_0 : i32, i32
  }
  func.func @transform_4(%arg0: i32) -> (i32, i32) {
    %c0_i32 = arith.constant 0 : i32
    %c0_i32_0 = arith.constant 0 : i32
    %c0_i32_1 = arith.constant 0 : i32
    return %c0_i32, %c0_i32_0 : i32, i32
  }
  func.func @transform_5(%arg0: i32) -> (i32, i32) {
    %c0_i32 = arith.constant 0 : i32
    %c0_i32_0 = arith.constant 0 : i32
    return %arg0, %c0_i32 : i32, i32
  }
}

module attributes {stable_mosaic.version = 11 : i64} {
  func.func @dqn_kernel(%arg0: i32, %arg1: memref<8x16xf32, #tpu.memory_space<vmem>>, %arg2: memref<128x16xf32, #tpu.memory_space<vmem>>, %arg3: memref<1x128xf32, #tpu.memory_space<vmem>>, %arg4: memref<4x128xf32, #tpu.memory_space<vmem>>, %arg5: memref<1x4xf32, #tpu.memory_space<vmem>>, %arg6: memref<8x4xf32, #tpu.memory_space<vmem>>) attributes {dimension_semantics = [#tpu.dimension_semantics<parallel>], iteration_bounds = array<i64: 1>, scalar_prefetch = 0 : i64, scratch_operands = 0 : i64, tpu.core_type = #tpu.core_type<tc>, window_params = [{transform_indices = @transform_0, window_bounds = array<i64: 8, 16>}, {pipeline_mode = #tpu.pipeline_mode<synchronous>, transform_indices = @transform_1, window_bounds = array<i64: 128, 16>}, {pipeline_mode = #tpu.pipeline_mode<synchronous>, transform_indices = @transform_2, window_bounds = array<i64: 1, 128>}, {pipeline_mode = #tpu.pipeline_mode<synchronous>, transform_indices = @transform_3, window_bounds = array<i64: 4, 128>}, {pipeline_mode = #tpu.pipeline_mode<synchronous>, transform_indices = @transform_4, window_bounds = array<i64: 1, 4>}, {transform_indices = @transform_5, window_bounds = array<i64: 8, 4>}]} {
    %c0 = arith.constant 0 : index
    %c0_0 = arith.constant 0 : index
    %0 = vector.load %arg1[%c0, %c0_0] : memref<8x16xf32, #tpu.memory_space<vmem>>, vector<8x16xf32>
    %c0_1 = arith.constant 0 : index
    %c0_2 = arith.constant 0 : index
    %1 = vector.load %arg2[%c0_1, %c0_2] : memref<128x16xf32, #tpu.memory_space<vmem>>, vector<128x16xf32>
    %cst = arith.constant dense<0.000000e+00> : vector<8x128xf32>
    %2 = tpu.matmul %0, %1, %cst {dimension_numbers = #tpu.dot_dimension_numbers<[1], [1], [0], [0], [0, 0, 1, 0], [], []>} : vector<8x16xf32>, vector<128x16xf32>, vector<8x128xf32> -> vector<8x128xf32>
    %c0_3 = arith.constant 0 : index
    %c0_4 = arith.constant 0 : index
    %3 = vector.load %arg3[%c0_3, %c0_4] : memref<1x128xf32, #tpu.memory_space<vmem>>, vector<1x128xf32>
    %4 = vector.broadcast %3 : vector<1x128xf32> to vector<8x128xf32>
    %5 = arith.addf %2, %4 : vector<8x128xf32>
    %cst_5 = arith.constant 0.000000e+00 : f32
    %6 = vector.broadcast %cst_5 : f32 to vector<8x128xf32>
    %7 = arith.maximumf %5, %6 : vector<8x128xf32>
    %c0_6 = arith.constant 0 : index
    %c0_7 = arith.constant 0 : index
    %8 = vector.load %arg4[%c0_6, %c0_7] : memref<4x128xf32, #tpu.memory_space<vmem>>, vector<4x128xf32>
    %cst_8 = arith.constant dense<0.000000e+00> : vector<8x4xf32>
    %9 = tpu.matmul %7, %8, %cst_8 {dimension_numbers = #tpu.dot_dimension_numbers<[1], [1], [0], [0], [0, 0, 1, 0], [], []>} : vector<8x128xf32>, vector<4x128xf32>, vector<8x4xf32> -> vector<8x4xf32>
    %c0_9 = arith.constant 0 : index
    %c0_10 = arith.constant 0 : index
    %10 = vector.load %arg5[%c0_9, %c0_10] : memref<1x4xf32, #tpu.memory_space<vmem>>, vector<1x4xf32>
    %11 = vector.broadcast %10 : vector<1x4xf32> to vector<8x4xf32>
    %12 = arith.addf %9, %11 : vector<8x4xf32>
    %c0_11 = arith.constant 0 : index
    %c0_12 = arith.constant 0 : index
    %13 = vector.load %arg6[%c0_11, %c0_12] : memref<8x4xf32, #tpu.memory_space<vmem>>, vector<8x4xf32>
    tpu.vector_store %arg6[%c0_11, %c0_12], %12 {strides = array<i32>} : memref<8x4xf32, #tpu.memory_space<vmem>>, vector<8x4xf32>,
    return
  }
  func.func @transform_0(%arg0: i32) -> (i32, i32) {
    %c0_i32 = arith.constant 0 : i32
    %c0_i32_0 = arith.constant 0 : i32
    return %arg0, %c0_i32 : i32, i32
  }
  func.func @transform_1(%arg0: i32) -> (i32, i32) {
    %c0_i32 = arith.constant 0 : i32
    %c0_i32_0 = arith.constant 0 : i32
    %c0_i32_1 = arith.constant 0 : i32
    return %c0_i32, %c0_i32_0 : i32, i32
  }
  func.func @transform_2(%arg0: i32) -> (i32, i32) {
    %c0_i32 = arith.constant 0 : i32
    %c0_i32_0 = arith.constant 0 : i32
    %c0_i32_1 = arith.constant 0 : i32
    return %c0_i32, %c0_i32_0 : i32, i32
  }
  func.func @transform_3(%arg0: i32) -> (i32, i32) {
    %c0_i32 = arith.constant 0 : i32
    %c0_i32_0 = arith.constant 0 : i32
    %c0_i32_1 = arith.constant 0 : i32
    return %c0_i32, %c0_i32_0 : i32, i32
  }
  func.func @transform_4(%arg0: i32) -> (i32, i32) {
    %c0_i32 = arith.constant 0 : i32
    %c0_i32_0 = arith.constant 0 : i32
    %c0_i32_1 = arith.constant 0 : i32
    return %c0_i32, %c0_i32_0 : i32, i32
  }
  func.func @transform_5(%arg0: i32) -> (i32, i32) {
    %c0_i32 = arith.constant 0 : i32
    %c0_i32_0 = arith.constant 0 : i32
    return %arg0, %c0_i32 : i32, i32
  }
}

</mosaic_0001>

<llo_original>
// kernel: tpu_custom_call.1
$region0: #{tpu_custom_call.1}
  #allocation0 [shape = 'u32[]', space=smem, size = 0x4, offset = 0x4, fixed_abs, tag = 'smem constant byte address 0x4 - core index']
  #allocation1 [shape = 'u32[72,128]{1,0:T(1,128)}', space=vmem, size = 0x9000, scoped, tag = 'internal scratch']
  %s0 = inlined_call_operand.vmem [shape: f32[8,16], index: 0, kind: input, shape index: {}]
  %s1 = inlined_call_operand.vmem [shape: f32[128,16], index: 1, kind: input, shape index: {}]
  %s2 = inlined_call_operand.vmem [shape: f32[1,128], index: 2, kind: input, shape index: {}]
  %s3 = inlined_call_operand.vmem [shape: f32[4,128], index: 3, kind: input, shape index: {}]
  %s4 = inlined_call_operand.vmem [shape: f32[1,4], index: 4, kind: input, shape index: {}]
  %s5 = inlined_call_operand.vmem [shape: f32[8,4], index: 5, kind: output, shape index: {}]
  %s6 = sld [smem:[#allocation0]]
  $region30: #{tpu_custom_call.1} parent=0
    _
  %s8 = ssub.s32 1, %s6
  %s9 = scalar_select 0, %s8, %s6
  // Predicated region
  $region2: #{tpu_custom_call.1} parent=0 // pred_check
    _
  $region3: #{tpu_custom_call.1} parent=0 // pred_check_branch
    %11 = sbr.rel (0) target = $region5
  $region4: #{tpu_custom_call.1} parent=0 // pred_region
    _
  $region5: #{tpu_custom_call.1} parent=0 // pred_fallthru
    _
  // Predicated region
  $region6: #{tpu_custom_call.1} parent=0 // pred_check
    _
  $region7: #{tpu_custom_call.1} parent=0 // pred_check_branch
    %13 = sbr.rel (0) target = $region9
  $region8: #{tpu_custom_call.1} parent=0 // pred_region
    _
  $region9: #{tpu_custom_call.1} parent=0 // pred_fallthru
    _
  // Predicated region
  $region10: #{tpu_custom_call.1} parent=0 // pred_check
    _
  $region11: #{tpu_custom_call.1} parent=0 // pred_check_branch
    %15 = sbr.rel (0) target = $region13
  $region12: #{tpu_custom_call.1} parent=0 // pred_region
    _
  $region13: #{tpu_custom_call.1} parent=0 // pred_fallthru
    _
  // Predicated region
  $region14: #{tpu_custom_call.1} parent=0 // pred_check
    _
  $region15: #{tpu_custom_call.1} parent=0 // pred_check_branch
    %17 = sbr.rel (0) target = $region17
  $region16: #{tpu_custom_call.1} parent=0 // pred_region
    _
  $region17: #{tpu_custom_call.1} parent=0 // pred_fallthru
    _
  // Predicated region
  $region18: #{tpu_custom_call.1} parent=0 // pred_check
    _
  $region19: #{tpu_custom_call.1} parent=0 // pred_check_branch
    %19 = sbr.rel (0) target = $region21
  $region20: #{tpu_custom_call.1} parent=0 // pred_region
    _
  $region21: #{tpu_custom_call.1} parent=0 // pred_fallthru
    _
  %v20 = vld [vmem:[%s0] sm:$0xff]
  %v21 = vld [vmem:[%s1] sm:$0xff]
  %v22 = vld [vmem:[%s1 + $0x8] sm:$0xff]
  %v23 = vld [vmem:[%s1 + $0x10] sm:$0xff]
  %v24 = vld [vmem:[%s1 + $0x18] sm:$0xff]
  %v25 = vld [vmem:[%s1 + $0x20] sm:$0xff]
  %v26 = vld [vmem:[%s1 + $0x28] sm:$0xff]
  %v27 = vld [vmem:[%s1 + $0x30] sm:$0xff]
  %v28 = vld [vmem:[%s1 + $0x38] sm:$0xff]
  %v29 = vld [vmem:[%s1 + $0x40] sm:$0xff]
  %v30 = vld [vmem:[%s1 + $0x48] sm:$0xff]
  %v31 = vld [vmem:[%s1 + $0x50] sm:$0xff]
  %v32 = vld [vmem:[%s1 + $0x58] sm:$0xff]
  %v33 = vld [vmem:[%s1 + $0x60] sm:$0xff]
  %v34 = vld [vmem:[%s1 + $0x68] sm:$0xff]
  %v35 = vld [vmem:[%s1 + $0x70] sm:$0xff]
  %v36 = vld [vmem:[%s1 + $0x78] sm:$0xff]
  %v37 = vld [vmem:[%s2] sm:$0x1]
  %v39 = vperm.slane %v37, 0
  %vm41 = vcmask 130048
  %v43 = vsel %vm41, %v20, 0
  %v46 = vsel %vm41, %v21, 0
  %v49 = vsel %vm41, %v22, 0
  %v52 = vsel %vm41, %v23, 0
  %v55 = vsel %vm41, %v24, 0
  %v58 = vsel %vm41, %v25, 0
  %v61 = vsel %vm41, %v26, 0
  %v64 = vsel %vm41, %v27, 0
  %v67 = vsel %vm41, %v28, 0
  %v70 = vsel %vm41, %v29, 0
  %v73 = vsel %vm41, %v30, 0
  %v76 = vsel %vm41, %v31, 0
  %v79 = vsel %vm41, %v32, 0
  %v82 = vsel %vm41, %v33, 0
  %v85 = vsel %vm41, %v34, 0
  %v88 = vsel %vm41, %v35, 0
  %v91 = vsel %vm41, %v36, 0
  %93 = vmatpush.xpose.msra.mxu0 %v91
  %94 = vmatpush.xpose.msra.mxu0 %v88
  %95 = vmatpush.xpose.msra.mxu0 %v85
  %96 = vmatpush.xpose.msra.mxu0 %v82
  %97 = vmatpush.xpose.msra.mxu0 %v79
  %98 = vmatpush.xpose.msra.mxu0 %v76
  %99 = vmatpush.xpose.msra.mxu0 %v73
  %100 = vmatpush.xpose.msra.mxu0 %v70
  %101 = vmatpush.xpose.msra.mxu0 %v67
  %102 = vmatpush.xpose.msra.mxu0 %v64
  %103 = vmatpush.xpose.msra.mxu0 %v61
  %104 = vmatpush.xpose.msra.mxu0 %v58
  %105 = vmatpush.xpose.msra.mxu0 %v55
  %106 = vmatpush.xpose.msra.mxu0 %v52
  %107 = vmatpush.xpose.msra.mxu0 %v49
  %108 = vmatpush.xpose.msra.mxu0 %v46
  %109 = vmatmul.f32.gmra.mxu0 %v43
  %v110 = vpop.f32.mrf.mxu0
  %v111 = vadd.f32 %v39, %v110
  %112 = vdwg.mxu0
  %v113 = vmax.f32 %v111, 0.0
  %v114 = vld [vmem:[%s3] sm:$0xf]
  %v115 = vld [vmem:[%s4] sm:$0x1]
  %v117 = vperm.slane %v115, 0
  %119 = vmatpush.xpose.msra.mxu0 0.0
  %120 = vmatpush.xpose.msra.mxu0 0.0
  %121 = vmatpush.xpose.msra.mxu0 0.0
  %122 = vmatpush.xpose.msra.mxu0 0.0
  %123 = vmatpush.xpose.msra.mxu0 0.0
  %124 = vmatpush.xpose.msra.mxu0 0.0
  %125 = vmatpush.xpose.msra.mxu0 0.0
  %126 = vmatpush.xpose.msra.mxu0 0.0
  %127 = vmatpush.xpose.msra.mxu0 0.0
  %128 = vmatpush.xpose.msra.mxu0 0.0
  %129 = vmatpush.xpose.msra.mxu0 0.0
  %130 = vmatpush.xpose.msra.mxu0 0.0
  %131 = vmatpush.xpose.msra.mxu0 0.0
  %132 = vmatpush.xpose.msra.mxu0 0.0
  %133 = vmatpush.xpose.msra.mxu0 0.0
  %134 = vmatpush.xpose.msra.mxu0 %v114
  %135 = vmatmul.f32.gmra.mxu0 %v113
  %v136 = vpop.f32.mrf.mxu0
  %v137 = vadd.f32 %v117, %v136
  %138 = vdwg.mxu0
  %vm139 = vcmask 31744
  %140 = vst.msk [vmem:[%s5] sm:$0xff] %vm139, %v137
  // Predicated region
  $region22: #{tpu_custom_call.1} parent=0 // pred_check
    _
  $region23: #{tpu_custom_call.1} parent=0 // pred_check_branch
    %142 = sbr.rel (0) target = $region25
  $region24: #{tpu_custom_call.1} parent=0 // pred_region
    _
  $region25: #{tpu_custom_call.1} parent=0 // pred_fallthru
    _
  // Predicated region
  $region26: #{tpu_custom_call.1} parent=0 // pred_check
    _
  $region27: #{tpu_custom_call.1} parent=0 // pred_check_branch
    %144 = sbr.rel (0) target = $region29
  $region28: #{tpu_custom_call.1} parent=0 // pred_region
    _
  $region29: #{tpu_custom_call.1} parent=0 // pred_fallthru
    _

// kernel: tpu_custom_call.1
$region0: #{tpu_custom_call.1}
  #allocation0 [shape = 'u32[]', space=smem, size = 0x4, offset = 0x4, fixed_abs, tag = 'smem constant byte address 0x4 - core index']
  #allocation1 [shape = 'u32[72,128]{1,0:T(1,128)}', space=vmem, size = 0x9000, scoped, tag = 'internal scratch']
  %s0 = inlined_call_operand.vmem [shape: f32[8,16], index: 0, kind: input, shape index: {}]
  %s1 = inlined_call_operand.vmem [shape: f32[128,16], index: 1, kind: input, shape index: {}]
  %s2 = inlined_call_operand.vmem [shape: f32[1,128], index: 2, kind: input, shape index: {}]
  %s3 = inlined_call_operand.vmem [shape: f32[4,128], index: 3, kind: input, shape index: {}]
  %s4 = inlined_call_operand.vmem [shape: f32[1,4], index: 4, kind: input, shape index: {}]
  %s5 = inlined_call_operand.vmem [shape: f32[8,4], index: 5, kind: output, shape index: {}]
  %s6 = sld [smem:[#allocation0]]
  $region30: #{tpu_custom_call.1} parent=0
    _
  %s8 = ssub.s32 1, %s6
  %s9 = scalar_select 0, %s8, %s6
  // Predicated region
  $region2: #{tpu_custom_call.1} parent=0 // pred_check
    _
  $region3: #{tpu_custom_call.1} parent=0 // pred_check_branch
    %11 = sbr.rel (0) target = $region5
  $region4: #{tpu_custom_call.1} parent=0 // pred_region
    _
  $region5: #{tpu_custom_call.1} parent=0 // pred_fallthru
    _
  // Predicated region
  $region6: #{tpu_custom_call.1} parent=0 // pred_check
    _
  $region7: #{tpu_custom_call.1} parent=0 // pred_check_branch
    %13 = sbr.rel (0) target = $region9
  $region8: #{tpu_custom_call.1} parent=0 // pred_region
    _
  $region9: #{tpu_custom_call.1} parent=0 // pred_fallthru
    _
  // Predicated region
  $region10: #{tpu_custom_call.1} parent=0 // pred_check
    _
  $region11: #{tpu_custom_call.1} parent=0 // pred_check_branch
    %15 = sbr.rel (0) target = $region13
  $region12: #{tpu_custom_call.1} parent=0 // pred_region
    _
  $region13: #{tpu_custom_call.1} parent=0 // pred_fallthru
    _
  // Predicated region
  $region14: #{tpu_custom_call.1} parent=0 // pred_check
    _
  $region15: #{tpu_custom_call.1} parent=0 // pred_check_branch
    %17 = sbr.rel (0) target = $region17
  $region16: #{tpu_custom_call.1} parent=0 // pred_region
    _
  $region17: #{tpu_custom_call.1} parent=0 // pred_fallthru
    _
  // Predicated region
  $region18: #{tpu_custom_call.1} parent=0 // pred_check
    _
  $region19: #{tpu_custom_call.1} parent=0 // pred_check_branch
    %19 = sbr.rel (0) target = $region21
  $region20: #{tpu_custom_call.1} parent=0 // pred_region
    _
  $region21: #{tpu_custom_call.1} parent=0 // pred_fallthru
    _
  %v20 = vld [vmem:[%s0] sm:$0xff]
  %v21 = vld [vmem:[%s1] sm:$0xff]
  %v22 = vld [vmem:[%s1 + $0x8] sm:$0xff]
  %v23 = vld [vmem:[%s1 + $0x10] sm:$0xff]
  %v24 = vld [vmem:[%s1 + $0x18] sm:$0xff]
  %v25 = vld [vmem:[%s1 + $0x20] sm:$0xff]
  %v26 = vld [vmem:[%s1 + $0x28] sm:$0xff]
  %v27 = vld [vmem:[%s1 + $0x30] sm:$0xff]
  %v28 = vld [vmem:[%s1 + $0x38] sm:$0xff]
  %v29 = vld [vmem:[%s1 + $0x40] sm:$0xff]
  %v30 = vld [vmem:[%s1 + $0x48] sm:$0xff]
  %v31 = vld [vmem:[%s1 + $0x50] sm:$0xff]
  %v32 = vld [vmem:[%s1 + $0x58] sm:$0xff]
  %v33 = vld [vmem:[%s1 + $0x60] sm:$0xff]
  %v34 = vld [vmem:[%s1 + $0x68] sm:$0xff]
  %v35 = vld [vmem:[%s1 + $0x70] sm:$0xff]
  %v36 = vld [vmem:[%s1 + $0x78] sm:$0xff]
  %v37 = vld [vmem:[%s2] sm:$0x1]
  %v39 = vperm.slane %v37, 0
  %vm41 = vcmask 130048
  %v43 = vsel %vm41, %v20, 0
  %v46 = vsel %vm41, %v21, 0
  %v49 = vsel %vm41, %v22, 0
  %v52 = vsel %vm41, %v23, 0
  %v55 = vsel %vm41, %v24, 0
  %v58 = vsel %vm41, %v25, 0
  %v61 = vsel %vm41, %v26, 0
  %v64 = vsel %vm41, %v27, 0
  %v67 = vsel %vm41, %v28, 0
  %v70 = vsel %vm41, %v29, 0
  %v73 = vsel %vm41, %v30, 0
  %v76 = vsel %vm41, %v31, 0
  %v79 = vsel %vm41, %v32, 0
  %v82 = vsel %vm41, %v33, 0
  %v85 = vsel %vm41, %v34, 0
  %v88 = vsel %vm41, %v35, 0
  %v91 = vsel %vm41, %v36, 0
  %93 = vmatpush.xpose.msra.mxu0 %v91
  %94 = vmatpush.xpose.msra.mxu0 %v88
  %95 = vmatpush.xpose.msra.mxu0 %v85
  %96 = vmatpush.xpose.msra.mxu0 %v82
  %97 = vmatpush.xpose.msra.mxu0 %v79
  %98 = vmatpush.xpose.msra.mxu0 %v76
  %99 = vmatpush.xpose.msra.mxu0 %v73
  %100 = vmatpush.xpose.msra.mxu0 %v70
  %101 = vmatpush.xpose.msra.mxu0 %v67
  %102 = vmatpush.xpose.msra.mxu0 %v64
  %103 = vmatpush.xpose.msra.mxu0 %v61
  %104 = vmatpush.xpose.msra.mxu0 %v58
  %105 = vmatpush.xpose.msra.mxu0 %v55
  %106 = vmatpush.xpose.msra.mxu0 %v52
  %107 = vmatpush.xpose.msra.mxu0 %v49
  %108 = vmatpush.xpose.msra.mxu0 %v46
  %109 = vmatmul.f32.gmra.mxu0 %v43
  %v110 = vpop.f32.mrf.mxu0
  %v111 = vadd.f32 %v39, %v110
  %112 = vdwg.mxu0
  %v113 = vmax.f32 %v111, 0.0
  %v114 = vld [vmem:[%s3] sm:$0xf]
  %v115 = vld [vmem:[%s4] sm:$0x1]
  %v117 = vperm.slane %v115, 0
  %119 = vmatpush.xpose.msra.mxu0 0.0
  %120 = vmatpush.xpose.msra.mxu0 0.0
  %121 = vmatpush.xpose.msra.mxu0 0.0
  %122 = vmatpush.xpose.msra.mxu0 0.0
  %123 = vmatpush.xpose.msra.mxu0 0.0
  %124 = vmatpush.xpose.msra.mxu0 0.0
  %125 = vmatpush.xpose.msra.mxu0 0.0
  %126 = vmatpush.xpose.msra.mxu0 0.0
  %127 = vmatpush.xpose.msra.mxu0 0.0
  %128 = vmatpush.xpose.msra.mxu0 0.0
  %129 = vmatpush.xpose.msra.mxu0 0.0
  %130 = vmatpush.xpose.msra.mxu0 0.0
  %131 = vmatpush.xpose.msra.mxu0 0.0
  %132 = vmatpush.xpose.msra.mxu0 0.0
  %133 = vmatpush.xpose.msra.mxu0 0.0
  %134 = vmatpush.xpose.msra.mxu0 %v114
  %135 = vmatmul.f32.gmra.mxu0 %v113
  %v136 = vpop.f32.mrf.mxu0
  %v137 = vadd.f32 %v117, %v136
  %138 = vdwg.mxu0
  %vm139 = vcmask 31744
  %140 = vst.msk [vmem:[%s5] sm:$0xff] %vm139, %v137
  // Predicated region
  $region22: #{tpu_custom_call.1} parent=0 // pred_check
    _
  $region23: #{tpu_custom_call.1} parent=0 // pred_check_branch
    %142 = sbr.rel (0) target = $region25
  $region24: #{tpu_custom_call.1} parent=0 // pred_region
    _
  $region25: #{tpu_custom_call.1} parent=0 // pred_fallthru
    _
  // Predicated region
  $region26: #{tpu_custom_call.1} parent=0 // pred_check
    _
  $region27: #{tpu_custom_call.1} parent=0 // pred_check_branch
    %144 = sbr.rel (0) target = $region29
  $region28: #{tpu_custom_call.1} parent=0 // pred_region
    _
  $region29: #{tpu_custom_call.1} parent=0 // pred_fallthru
    _

</llo_original>
